<compile_context>
chip_gen: v6e
topology: v6e:2x2x1
jax: 0.10.0
libtpu: 0.0.40
codegen_flags: <defaults>
</compile_context>

<pallas_src>
import functools

import jax
import jax.numpy as jnp
from jax.experimental import pallas as pl
from jax.experimental.pallas import tpu as pltpu

_LANE = 128
_SUBLANE = 8


def _round_up(n, m):
    return ((n + m - 1) // m) * m


def _pad_axis(a, axis, target):
    pad = target - a.shape[axis]
    if pad <= 0:
        return a
    widths = [(0, 0)] * a.ndim
    widths[axis] = (0, pad)
    return jnp.pad(a, widths)


def _default_act_dtype():
    """bf16 tanh on v6e/v7x (EUP has a bf16 path); f32 on v5e and older."""
    try:
        kind = jax.devices()[0].device_kind.lower()
    except Exception:
        return jnp.float32
    if any(v in kind for v in ("v2", "v3", "v4", "v5")):
        return jnp.float32
    return jnp.bfloat16


def prepare_params(params, matmul_dtype=jnp.bfloat16):
    """Pad widths to lane-dense 128-multiples and cast ONCE, outside the forward.

    Zero padding keeps the math exact: padded hidden lanes see bias 0 ->
    tanh(0)=0, and the corresponding next-layer weight rows are zero.
    """
    h1p = _round_up(params["w1"].shape[1], _LANE)
    h2p = _round_up(params["w2"].shape[1], _LANE)
    outp = _round_up(params["w3"].shape[1], _LANE)
    return {
        "w1": _pad_axis(params["w1"], 1, h1p).astype(matmul_dtype),
        "b1": _pad_axis(params["b1"], 1, h1p).astype(jnp.float32),
        "w2": _pad_axis(_pad_axis(params["w2"], 0, h1p), 1, h2p).astype(matmul_dtype),
        "b2": _pad_axis(params["b2"], 1, h2p).astype(jnp.float32),
        "w3": _pad_axis(_pad_axis(params["w3"], 0, h2p), 1, outp).astype(matmul_dtype),
        "b3": _pad_axis(params["b3"], 1, outp).astype(jnp.float32),
    }


def _mlp_kernel(x_ref, w1_ref, b1_ref, w2_ref, b2_ref, w3_ref, b3_ref, o_ref,
                *, act_dtype):
    """Fused fc1->tanh->fc2->tanh->fc3 on one (TB, in_size) batch tile."""
    # In-kernel f32 -> bf16 cast of the input tile (VPU slack is huge here).
    x = x_ref[...].astype(w1_ref.dtype)

    # fc1 + tanh (f32 accumulate + bias; tanh in act_dtype).
    h = jnp.dot(x, w1_ref[...], preferred_element_type=jnp.float32) + b1_ref[...]
    h = jnp.tanh(h.astype(act_dtype))

    # fc2 + tanh.
    h = (jnp.dot(h.astype(w2_ref.dtype), w2_ref[...],
                 preferred_element_type=jnp.float32) + b2_ref[...])
    h = jnp.tanh(h.astype(act_dtype))

    # fc3 (no activation).
    out = (jnp.dot(h.astype(w3_ref.dtype), w3_ref[...],
                   preferred_element_type=jnp.float32) + b3_ref[...])
    o_ref[...] = out.astype(o_ref.dtype)


def linear4_forward(x, params, *, out_size=None, block_batch=1024,
                    out_dtype=jnp.bfloat16, act_dtype=None,
                    min_pallas_batch=32):
    """Fused 3-layer MLP forward.

    x:      (batch, in_channels=1, input_size) float32 (channel dim squeezed).
    params: output of prepare_params() -- pre-padded, pre-cast weights/biases
            stored as (in, out).
    """
    if act_dtype is None:
        act_dtype = _default_act_dtype()

    w1, b1 = params["w1"], params["b1"]
    w2, b2 = params["w2"], params["b2"]
    w3, b3 = params["w3"], params["b3"]

    # Glue: torch.squeeze drops size-1 dims; canonical input is (B, 1, L).
    if x.ndim == 3 and x.shape[1] == 1:
        x2d = jnp.squeeze(x, axis=1)
    else:
        x2d = jnp.squeeze(x)
    if x2d.ndim == 1:  # batch == 1 edge case
        x2d = x2d[None, :]

    batch, in_size = x2d.shape
    h1p, h2p, outp = w1.shape[1], w2.shape[1], w3.shape[1]
    if out_size is None:
        out_size = outp

    # Tiny batch: launch + DMA latency dominates; plain XLA (f32) is faster.
    if batch < min_pallas_batch:
        h = jnp.tanh(x2d @ w1.astype(jnp.float32) + b1)
        h = jnp.tanh(h @ w2.astype(jnp.float32) + b2)
        out = h @ w3.astype(jnp.float32) + b3
        return out[:, :out_size].astype(out_dtype)

    # Batch tile: as large as block_batch, but split into >=2 grid steps so
    # both TensorCores get work on v7x (dimension_semantics=("parallel",)).
    # Multiple of 8 sublanes; no batch padding -- Pallas masks the last block.
    tb = min(block_batch, max(_SUBLANE, _round_up(pl.cdiv(batch, 2), _SUBLANE)))
    grid = (pl.cdiv(batch, tb),)

    const = lambda shape: pl.BlockSpec(shape, lambda i: (0, 0))
    in_specs = [
        pl.BlockSpec((tb, in_size), lambda i: (i, 0)),   # x tile: streamed (f32)
        const(w1.shape), const(b1.shape),                # weights: resident
        const(w2.shape), const(b2.shape),
        const(w3.shape), const(b3.shape),
    ]
    out_specs = pl.BlockSpec((tb, outp), lambda i: (i, 0))

    flops = 2 * batch * (in_size * h1p + h1p * h2p + h2p * outp)
    weight_bytes = sum(int(a.size) * a.dtype.itemsize
                       for a in (w1, b1, w2, b2, w3, b3))
    bytes_accessed = (int(x2d.size) * x2d.dtype.itemsize
                      + batch * outp * jnp.dtype(out_dtype).itemsize
                      + weight_bytes)
    cost = pl.CostEstimate(flops=flops,
                           transcendentals=batch * (h1p + h2p),
                           bytes_accessed=bytes_accessed)

    out_padded = pl.pallas_call(
        functools.partial(_mlp_kernel, act_dtype=act_dtype),
        out_shape=jax.ShapeDtypeStruct((batch, outp), out_dtype),
        grid=grid,
        in_specs=in_specs,
        out_specs=out_specs,
        compiler_params=pltpu.CompilerParams(
            dimension_semantics=("parallel",)),
        cost_estimate=cost,
    )(x2d, w1, b1, w2, b2, w3, b3)

    # Column slice only (no batch padding anymore); fuses inside the same jit.
    return out_padded[:, :out_size]


def init_params(key, input_size, hidden_sizes, output_size, dtype=jnp.float32):
    """Deterministic synthetic init; weights stored as (in, out)."""
    k1, k2, k3, k4, k5, k6 = jax.random.split(key, 6)

    def linear(kw, kb, fan_in, fan_out):
        # Mimic PyTorch default uniform(-1/sqrt(fan_in), 1/sqrt(fan_in)).
        bound = 1.0 / jnp.sqrt(float(fan_in))
        w = jax.random.uniform(kw, (fan_in, fan_out), dtype, -bound, bound)
        b = jax.random.uniform(kb, (1, fan_out), dtype, -bound, bound)
        return w, b

    w1, b1 = linear(k1, k2, input_size, hidden_sizes[0])
    w2, b2 = linear(k3, k4, hidden_sizes[0], hidden_sizes[1])
    w3, b3 = linear(k5, k6, hidden_sizes[1], output_size)
    return {"w1": w1, "b1": b1, "w2": w2, "b2": b2, "w3": w3, "b3": b3}


if __name__ == "__main__":
    key = jax.random.PRNGKey(0)
    kx, kp = jax.random.split(key)

    batch = 200            # 2 grid steps incl. a partial (masked) last block
    in_channels = 1
    input_size = 32
    hidden_sizes = [64, 64, 64]
    output_size = 10

    # Input: (batch, in_channels, input_size); channel dim squeezed in forward.
    x = jax.random.normal(kx, (batch, in_channels, input_size), jnp.float32)
    raw_params = init_params(kp, input_size, hidden_sizes, output_size)
    # Pad + cast weights once, outside the forward path.
    params = prepare_params(raw_params)

    fwd = jax.jit(functools.partial(
        linear4_forward, out_size=output_size, block_batch=128))
    out = jax.block_until_ready(fwd(x, params))

    # Reference check in plain f32 JAX. bf16 MXU operands + bf16 tanh (v6e/v7x)
    # + bf16 output store => loose tolerance.
    x2d = jnp.squeeze(x, axis=1)
    ref = jnp.tanh(x2d @ raw_params["w1"] + raw_params["b1"])
    ref = jnp.tanh(ref @ raw_params["w2"] + raw_params["b2"])
    ref = ref @ raw_params["w3"] + raw_params["b3"]

    assert out.shape == (batch, output_size)
    max_err = float(jnp.max(jnp.abs(out.astype(jnp.float32) - ref)))
    assert max_err < 5e-2, f"max abs error {max_err}"

    print("KERNEL_OK")
</pallas_src>

<mosaic_0001>
module attributes {stable_mosaic.version = 11 : i64} {
  func.func @_mlp_kernel(%arg0: i32, %arg1: memref<104x32xf32, #tpu.memory_space<vmem>>, %arg2: memref<32x128xbf16, #tpu.memory_space<vmem>>, %arg3: memref<1x128xf32, #tpu.memory_space<vmem>>, %arg4: memref<128x128xbf16, #tpu.memory_space<vmem>>, %arg5: memref<1x128xf32, #tpu.memory_space<vmem>>, %arg6: memref<128x128xbf16, #tpu.memory_space<vmem>>, %arg7: memref<1x128xf32, #tpu.memory_space<vmem>>, %arg8: memref<104x128xbf16, #tpu.memory_space<vmem>>) attributes {dimension_semantics = [#tpu.dimension_semantics<parallel>], iteration_bounds = array<i64: 2>, scalar_prefetch = 0 : i64, scratch_operands = 0 : i64, tpu.core_type = #tpu.core_type<tc>, window_params = [{transform_indices = @transform_0, window_bounds = array<i64: 104, 32>}, {pipeline_mode = #tpu.pipeline_mode<synchronous>, transform_indices = @transform_1, window_bounds = array<i64: 32, 128>}, {pipeline_mode = #tpu.pipeline_mode<synchronous>, transform_indices = @transform_2, window_bounds = array<i64: 1, 128>}, {pipeline_mode = #tpu.pipeline_mode<synchronous>, transform_indices = @transform_3, window_bounds = array<i64: 128, 128>}, {pipeline_mode = #tpu.pipeline_mode<synchronous>, transform_indices = @transform_4, window_bounds = array<i64: 1, 128>}, {pipeline_mode = #tpu.pipeline_mode<synchronous>, transform_indices = @transform_5, window_bounds = array<i64: 128, 128>}, {pipeline_mode = #tpu.pipeline_mode<synchronous>, transform_indices = @transform_6, window_bounds = array<i64: 1, 128>}, {transform_indices = @transform_7, window_bounds = array<i64: 104, 128>}]} {
    %c0 = arith.constant 0 : index
    %c0_0 = arith.constant 0 : index
    %0 = vector.load %arg1[%c0, %c0_0] : memref<104x32xf32, #tpu.memory_space<vmem>>, vector<104x32xf32>
    %1 = arith.truncf %0 : vector<104x32xf32> to vector<104x32xbf16>
    %c0_1 = arith.constant 0 : index
    %c0_2 = arith.constant 0 : index
    %2 = vector.load %arg2[%c0_1, %c0_2] : memref<32x128xbf16, #tpu.memory_space<vmem>>, vector<32x128xbf16>
    %cst = arith.constant dense<0.000000e+00> : vector<104x128xf32>
    %3 = tpu.matmul %1, %2, %cst {dimension_numbers = #tpu.dot_dimension_numbers<[1], [0], [0], [1], [0, 0, 1, 1], [], []>} : vector<104x32xbf16>, vector<32x128xbf16>, vector<104x128xf32> -> vector<104x128xf32>
    %c0_3 = arith.constant 0 : index
    %c0_4 = arith.constant 0 : index
    %4 = vector.load %arg3[%c0_3, %c0_4] : memref<1x128xf32, #tpu.memory_space<vmem>>, vector<1x128xf32>
    %5 = vector.broadcast %4 : vector<1x128xf32> to vector<104x128xf32>
    %6 = arith.addf %3, %5 : vector<104x128xf32>
    %7 = arith.truncf %6 : vector<104x128xf32> to vector<104x128xbf16>
    %8 = math.tanh %7 : vector<104x128xbf16>
    %c0_5 = arith.constant 0 : index
    %c0_6 = arith.constant 0 : index
    %9 = vector.load %arg4[%c0_5, %c0_6] : memref<128x128xbf16, #tpu.memory_space<vmem>>, vector<128x128xbf16>
    %cst_7 = arith.constant dense<0.000000e+00> : vector<104x128xf32>
    %10 = tpu.matmul %8, %9, %cst_7 {dimension_numbers = #tpu.dot_dimension_numbers<[1], [0], [0], [1], [0, 0, 1, 1], [], []>} : vector<104x128xbf16>, vector<128x128xbf16>, vector<104x128xf32> -> vector<104x128xf32>
    %c0_8 = arith.constant 0 : index
    %c0_9 = arith.constant 0 : index
    %11 = vector.load %arg5[%c0_8, %c0_9] : memref<1x128xf32, #tpu.memory_space<vmem>>, vector<1x128xf32>
    %12 = vector.broadcast %11 : vector<1x128xf32> to vector<104x128xf32>
    %13 = arith.addf %10, %12 : vector<104x128xf32>
    %14 = arith.truncf %13 : vector<104x128xf32> to vector<104x128xbf16>
    %15 = math.tanh %14 : vector<104x128xbf16>
    %c0_10 = arith.constant 0 : index
    %c0_11 = arith.constant 0 : index
    %16 = vector.load %arg6[%c0_10, %c0_11] : memref<128x128xbf16, #tpu.memory_space<vmem>>, vector<128x128xbf16>
    %cst_12 = arith.constant dense<0.000000e+00> : vector<104x128xf32>
    %17 = tpu.matmul %15, %16, %cst_12 {dimension_numbers = #tpu.dot_dimension_numbers<[1], [0], [0], [1], [0, 0, 1, 1], [], []>} : vector<104x128xbf16>, vector<128x128xbf16>, vector<104x128xf32> -> vector<104x128xf32>
    %c0_13 = arith.constant 0 : index
    %c0_14 = arith.constant 0 : index
    %18 = vector.load %arg7[%c0_13, %c0_14] : memref<1x128xf32, #tpu.memory_space<vmem>>, vector<1x128xf32>
    %19 = vector.broadcast %18 : vector<1x128xf32> to vector<104x128xf32>
    %20 = arith.addf %17, %19 : vector<104x128xf32>
    %21 = arith.truncf %20 : vector<104x128xf32> to vector<104x128xbf16>
    %c0_15 = arith.constant 0 : index
    %c0_16 = arith.constant 0 : index
    %22 = vector.load %arg8[%c0_15, %c0_16] : memref<104x128xbf16, #tpu.memory_space<vmem>>, vector<104x128xbf16>
    tpu.vector_store %arg8[%c0_15, %c0_16], %21 {strides = array<i32>} : memref<104x128xbf16, #tpu.memory_space<vmem>>, vector<104x128xbf16>,
    return
  }
  func.func @transform_0(%arg0: i32) -> (i32, i32) {
    %c0_i32 = arith.constant 0 : i32
    %c0_i32_0 = arith.constant 0 : i32
    return %arg0, %c0_i32 : i32, i32
  }
  func.func @transform_1(%arg0: i32) -> (i32, i32) {
    %c0_i32 = arith.constant 0 : i32
    %c0_i32_0 = arith.constant 0 : i32
    %c0_i32_1 = arith.constant 0 : i32
    return %c0_i32, %c0_i32_0 : i32, i32
  }
  func.func @transform_2(%arg0: i32) -> (i32, i32) {
    %c0_i32 = arith.constant 0 : i32
    %c0_i32_0 = arith.constant 0 : i32
    %c0_i32_1 = arith.constant 0 : i32
    return %c0_i32, %c0_i32_0 : i32, i32
  }
  func.func @transform_3(%arg0: i32) -> (i32, i32) {
    %c0_i32 = arith.constant 0 : i32
    %c0_i32_0 = arith.constant 0 : i32
    %c0_i32_1 = arith.constant 0 : i32
    return %c0_i32, %c0_i32_0 : i32, i32
  }
  func.func @transform_4(%arg0: i32) -> (i32, i32) {
    %c0_i32 = arith.constant 0 : i32
    %c0_i32_0 = arith.constant 0 : i32
    %c0_i32_1 = arith.constant 0 : i32
    return %c0_i32, %c0_i32_0 : i32, i32
  }
  func.func @transform_5(%arg0: i32) -> (i32, i32) {
    %c0_i32 = arith.constant 0 : i32
    %c0_i32_0 = arith.constant 0 : i32
    %c0_i32_1 = arith.constant 0 : i32
    return %c0_i32, %c0_i32_0 : i32, i32
  }
  func.func @transform_6(%arg0: i32) -> (i32, i32) {
    %c0_i32 = arith.constant 0 : i32
    %c0_i32_0 = arith.constant 0 : i32
    %c0_i32_1 = arith.constant 0 : i32
    return %c0_i32, %c0_i32_0 : i32, i32
  }
  func.func @transform_7(%arg0: i32) -> (i32, i32) {
    %c0_i32 = arith.constant 0 : i32
    %c0_i32_0 = arith.constant 0 : i32
    return %arg0, %c0_i32 : i32, i32
  }
}

</mosaic_0001>

<llo_original>
// kernel: linear4_forward.1
$region0: #{linear4_forward.1}
  #allocation0 [shape = 'u32[]', space=smem, size = 0x4, offset = 0x4, fixed_abs, tag = 'smem constant byte address 0x4 - core index']
  #allocation1 [shape = 'u32[144,128]{1,0:T(1,128)}', space=vmem, size = 0x12000, scoped, tag = 'internal scratch']
  %s0 = inlined_call_operand.vmem [shape: f32[200,32], index: 0, kind: input, shape index: {}]
  %s1 = inlined_call_operand.vmem [shape: bf16[32,128], index: 1, kind: input, shape index: {}]
  %s2 = inlined_call_operand.vmem [shape: f32[1,128], index: 2, kind: input, shape index: {}]
  %s3 = inlined_call_operand.vmem [shape: bf16[128,128], index: 3, kind: input, shape index: {}]
  %s4 = inlined_call_operand.vmem [shape: f32[1,128], index: 4, kind: input, shape index: {}]
  %s5 = inlined_call_operand.vmem [shape: bf16[128,128], index: 5, kind: input, shape index: {}]
  %s6 = inlined_call_operand.vmem [shape: f32[1,128], index: 6, kind: input, shape index: {}]
  %s7 = inlined_call_operand.vmem [shape: bf16[200,128], index: 7, kind: output, shape index: {}]
  %s8 = sld [smem:[#allocation0]]
  $region105: #{linear4_forward.1} parent=0
    _
  %s10 = ssub.s32 1, %s8
  %s11 = scalar_select 0, %s10, %s8
  $region1: #{linear4_forward.1} parent=0
    #allocation2 [shape = 'u8[53248]{0}', space=vmem, size = 0xd000, scoped, tag = 'output window, operand 0']
    loop: start=0, step=1, limit=4
    $region2: #{linear4_forward.1} parent=1 // loop_pre_header
      _
    $region3: #{linear4_forward.1} parent=1 // loop_header
      %s13 = sphi 0, %s17
      %p14 = scmp.ge.s32.totalorder %s13, 4
      %s23 = sphi 0, %s25
      %s26 = sphi 0, %s23
      %s27 = sphi 0, %s26
      %s43 = sphi 0, %s27
      %s47 = sphi 0, %s47
      %s49 = sphi 0, %s47
      %s50 = sphi 0, %s49
      %s64 = sphi 0, %s50
      %s68 = sphi 0, %s68
      %s70 = sphi 0, %s68
      %s71 = sphi 0, %s70
      %s85 = sphi 0, %s71
      %s89 = sphi 0, %s89
      %s91 = sphi 0, %s89
      %s92 = sphi 0, %s91
      %s106 = sphi 0, %s92
      %s110 = sphi 0, %s110
      %s112 = sphi 0, %s110
      %s113 = sphi 0, %s112
      %s127 = sphi 0, %s113
      %s131 = sphi 0, %s131
      %s133 = sphi 0, %s131
      %s134 = sphi 0, %s133
      %s148 = sphi 0, %s134
      %s152 = sphi 0, %s152
      %s154 = sphi 0, %s152
      %s155 = sphi 0, %s154
      %s169 = sphi 0, %s155
      %s175 = sphi 0, %s177
      %s178 = sphi 0, %s175
      %s179 = sphi 0, %s178
      %s195 = sphi 0, %s179
    $region4: #{linear4_forward.1} parent=1 // loop_header_branch
      %16 = sbr.rel (%p14) target = $region8
    $region5: #{linear4_forward.1} parent=1 // loop_body
      %s18 = ssub.s32 %s13, 1
      %s19 = ssub.s32 %s13, 2
      %s20 = sadd.s32 %s13, 1
      %s21 = ssub.s32 %s13, %s20
      %p22 = scmp.eq.s32.totalorder %s21, 0
      %s24 = sadd.s32 %s23, 1
      %s25 = scalar_select %p22, %s23, %s24
      %p28 = pneg %p22
      %p29 = scmp.eq.s32.totalorder %s13, 1
      %p30 = por %p28, %p29
      %p31 = scmp.ne.s32.totalorder %s23, %s26
      %p32 = scmp.eq.s32.totalorder %s13, 0
      %p33 = por %p31, %p32
      %p34 = scmp.ne.s32.totalorder %s23, %s26
      %p35 = scmp.eq.s32.totalorder %s18, 1
      %p36 = por %p34, %p35
      %p37 = scmp.ne.s32.totalorder %s26, %s27
      %p38 = scmp.eq.s32.totalorder %s18, 0
      %p39 = por %p37, %p38
      %p40 = scmp.ne.s32.totalorder %s26, %s27
      %p41 = scmp.eq.s32.totalorder %s19, 1
      %p42 = por %p40, %p41
      %p44 = scmp.ne.s32.totalorder %s27, %s43
      %p45 = scmp.eq.s32.totalorder %s19, 0
      %p46 = por %p44, %p45
      %s48 = sadd.s32 %s47, 1
      %p51 = scmp.eq.s32.totalorder %s13, 1
      %p52 = scmp.ne.s32.totalorder %s47, %s49
      %p53 = scmp.eq.s32.totalorder %s13, 0
      %p54 = por %p52, %p53
      %p55 = scmp.ne.s32.totalorder %s47, %s49
      %p56 = scmp.eq.s32.totalorder %s18, 1
      %p57 = por %p55, %p56
      %p58 = scmp.ne.s32.totalorder %s49, %s50
      %p59 = scmp.eq.s32.totalorder %s18, 0
      %p60 = por %p58, %p59
      %p61 = scmp.ne.s32.totalorder %s49, %s50
      %p62 = scmp.eq.s32.totalorder %s19, 1
      %p63 = por %p61, %p62
      %p65 = scmp.ne.s32.totalorder %s50, %s64
      %p66 = scmp.eq.s32.totalorder %s19, 0
      %p67 = por %p65, %p66
      %s69 = sadd.s32 %s68, 1
      %p72 = scmp.eq.s32.totalorder %s13, 1
      %p73 = scmp.ne.s32.totalorder %s68, %s70
      %p74 = scmp.eq.s32.totalorder %s13, 0
      %p75 = por %p73, %p74
      %p76 = scmp.ne.s32.totalorder %s68, %s70
      %p77 = scmp.eq.s32.totalorder %s18, 1
      %p78 = por %p76, %p77
      %p79 = scmp.ne.s32.totalorder %s70, %s71
      %p80 = scmp.eq.s32.totalorder %s18, 0
      %p81 = por %p79, %p80
      %p82 = scmp.ne.s32.totalorder %s70, %s71
      %p83 = scmp.eq.s32.totalorder %s19, 1
      %p84 = por %p82, %p83
      %p86 = scmp.ne.s32.totalorder %s71, %s85
      %p87 = scmp.eq.s32.totalorder %s19, 0
      %p88 = por %p86, %p87
      %s90 = sadd.s32 %s89, 1
      %p93 = scmp.eq.s32.totalorder %s13, 1
      %p94 = scmp.ne.s32.totalorder %s89, %s91
      %p95 = scmp.eq.s32.totalorder %s13, 0
      %p96 = por %p94, %p95
      %p97 = scmp.ne.s32.totalorder %s89, %s91
      %p98 = scmp.eq.s32.totalorder %s18, 1
      %p99 = por %p97, %p98
      %p100 = scmp.ne.s32.totalorder %s91, %s92
      %p101 = scmp.eq.s32.totalorder %s18, 0
      %p102 = por %p100, %p101
      %p103 = scmp.ne.s32.totalorder %s91, %s92
      %p104 = scmp.eq.s32.totalorder %s19, 1
      %p105 = por %p103, %p104
      %p107 = scmp.ne.s32.totalorder %s92, %s106
      %p108 = scmp.eq.s32.totalorder %s19, 0
      %p109 = por %p107, %p108
      %s111 = sadd.s32 %s110, 1
      %p114 = scmp.eq.s32.totalorder %s13, 1
      %p115 = scmp.ne.s32.totalorder %s110, %s112
      %p116 = scmp.eq.s32.totalorder %s13, 0
      %p117 = por %p115, %p116
      %p118 = scmp.ne.s32.totalorder %s110, %s112
      %p119 = scmp.eq.s32.totalorder %s18, 1
      %p120 = por %p118, %p119
      %p121 = scmp.ne.s32.totalorder %s112, %s113
      %p122 = scmp.eq.s32.totalorder %s18, 0
      %p123 = por %p121, %p122
      %p124 = scmp.ne.s32.totalorder %s112, %s113
      %p125 = scmp.eq.s32.totalorder %s19, 1
      %p126 = por %p124, %p125
      %p128 = scmp.ne.s32.totalorder %s113, %s127
      %p129 = scmp.eq.s32.totalorder %s19, 0
      %p130 = por %p128, %p129
      %s132 = sadd.s32 %s131, 1
      %p135 = scmp.eq.s32.totalorder %s13, 1
      %p136 = scmp.ne.s32.totalorder %s131, %s133
      %p137 = scmp.eq.s32.totalorder %s13, 0
      %p138 = por %p136, %p137
      %p139 = scmp.ne.s32.totalorder %s131, %s133
      %p140 = scmp.eq.s32.totalorder %s18, 1
      %p141 = por %p139, %p140
      %p142 = scmp.ne.s32.totalorder %s133, %s134
      %p143 = scmp.eq.s32.totalorder %s18, 0
      %p144 = por %p142, %p143
      %p145 = scmp.ne.s32.totalorder %s133, %s134
      %p146 = scmp.eq.s32.totalorder %s19, 1
      %p147 = por %p145, %p146
      %p149 = scmp.ne.s32.totalorder %s134, %s148
      %p150 = scmp.eq.s32.totalorder %s19, 0
      %p151 = por %p149, %p150
      %s153 = sadd.s32 %s152, 1
      %p156 = scmp.eq.s32.totalorder %s13, 1
      %p157 = scmp.ne.s32.totalorder %s152, %s154
      %p158 = scmp.eq.s32.totalorder %s13, 0
      %p159 = por %p157, %p158
      %p160 = scmp.ne.s32.totalorder %s152, %s154
      %p161 = scmp.eq.s32.totalorder %s18, 1
      %p162 = por %p160, %p161
      %p163 = scmp.ne.s32.totalorder %s154, %s155
      %p164 = scmp.eq.s32.totalorder %s18, 0
      %p165 = por %p163, %p164
      %p166 = scmp.ne.s32.totalorder %s154, %s155
      %p167 = scmp.eq.s32.totalorder %s19, 1
      %p168 = por %p166, %p167
      %p170 = scmp.ne.s32.totalorder %s155, %s169
      %p171 = scmp.eq.s32.totalorder %s19, 0
      %p172 = por %p170, %p171
      %s173 = ssub.s32 %s13, %s20
      %p174 = scmp.eq.s32.totalorder %s173, 0
      %s176 = sadd.s32 %s175, 1
      %s177 = scalar_select %p174, %s175, %s176
      %p180 = pneg %p174
      %p181 = scmp.eq.s32.totalorder %s13, 1
      %p182 = por %p180, %p181
      %p183 = scmp.ne.s32.totalorder %s175, %s178
      %p184 = scmp.eq.s32.totalorder %s13, 0
      %p185 = por %p183, %p184
      %p186 = scmp.ne.s32.totalorder %s175, %s178
      %p187 = scmp.eq.s32.totalorder %s18, 1
      %p188 = por %p186, %p187
      %p189 = scmp.ne.s32.totalorder %s178, %s179
      %p190 = scmp.eq.s32.totalorder %s18, 0
      %p191 = por %p189, %p190
      %p192 = scmp.ne.s32.totalorder %s178, %s179
      %p193 = scmp.eq.s32.totalorder %s19, 1
      %p194 = por %p192, %p193
      %p196 = scmp.ne.s32.totalorder %s179, %s195
      %p197 = scmp.eq.s32.totalorder %s19, 0
      %p198 = por %p196, %p197
      %p199 = scmp.le.s32.totalorder 1, %s13
      %p200 = scmp.lt.s32.totalorder %s13, 3
      %p201 = pnand %p199, %p200
      %p202 = pneg %p201
      // Predicated region
      $region9: #{linear4_forward.1} parent=5 // pred_check
        _
      $region10: #{linear4_forward.1} parent=5 // pred_check_branch
        %204 = sbr.rel (%p201) target = $region12
      $region11: #{linear4_forward.1} parent=5 // pred_region
        %s205 = ssub.s32 %s13, 1
        // Predicated region
        $region13: #{linear4_forward.1} parent=11 // pred_check
          %p206 = pneg %p60
        $region14: #{linear4_forward.1} parent=11 // pred_check_branch
          %208 = sbr.rel (%p206) target = $region16
        $region15: #{linear4_forward.1} parent=11 // pred_region
          _
        $region16: #{linear4_forward.1} parent=11 // pred_fallthru
          _
        // Predicated region
        $region17: #{linear4_forward.1} parent=11 // pred_check
          %p209 = pneg %p81
        $region18: #{linear4_forward.1} parent=11 // pred_check_branch
          %211 = sbr.rel (%p209) target = $region20
        $region19: #{linear4_forward.1} parent=11 // pred_region
          _
        $region20: #{linear4_forward.1} parent=11 // pred_fallthru
          _
        // Predicated region
        $region21: #{linear4_forward.1} parent=11 // pred_check
          %p212 = pneg %p102
        $region22: #{linear4_forward.1} parent=11 // pred_check_branch
          %214 = sbr.rel (%p212) target = $region24
        $region23: #{linear4_forward.1} parent=11 // pred_region
          _
        $region24: #{linear4_forward.1} parent=11 // pred_fallthru
          _
        // Predicated region
        $region25: #{linear4_forward.1} parent=11 // pred_check
          %p215 = pneg %p123
        $region26: #{linear4_forward.1} parent=11 // pred_check_branch
          %217 = sbr.rel (%p215) target = $region28
        $region27: #{linear4_forward.1} parent=11 // pred_region
          _
        $region28: #{linear4_forward.1} parent=11 // pred_fallthru
          _
        // Predicated region
        $region29: #{linear4_forward.1} parent=11 // pred_check
          %p218 = pneg %p144
        $region30: #{linear4_forward.1} parent=11 // pred_check_branch
          %220 = sbr.rel (%p218) target = $region32
        $region31: #{linear4_forward.1} parent=11 // pred_region
          _
        $region32: #{linear4_forward.1} parent=11 // pred_fallthru
          _
        // Predicated region
        $region33: #{linear4_forward.1} parent=11 // pred_check
          %p221 = pneg %p165
        $region34: #{linear4_forward.1} parent=11 // pred_check_branch
          %223 = sbr.rel (%p221) target = $region36
        $region35: #{linear4_forward.1} parent=11 // pred_region
          _
        $region36: #{linear4_forward.1} parent=11 // pred_fallthru
          _
      $region12: #{linear4_forward.1} parent=5 // pred_fallthru
        _
      %p224 = scmp.lt.s32.totalorder %s13, 2
      // Predicated region
      $region37: #{linear4_forward.1} parent=5 // pred_check
        %p225 = pneg %p224
      $region38: #{linear4_forward.1} parent=5 // pred_check_branch
        %227 = sbr.rel (%p225) target = $region40
      $region39: #{linear4_forward.1} parent=5 // pred_region
        // Predicated region
        $region41: #{linear4_forward.1} parent=39 // pred_check
          %p228 = pneg %p33
        $region42: #{linear4_forward.1} parent=39 // pred_check_branch
          %230 = sbr.rel (%p228) target = $region44
        $region43: #{linear4_forward.1} parent=39 // pred_region
          %s231 = smul.u32 13, %s13
          %s232 = ssub.s32 25, %s231
          %p233 = scmp.lt.s32.totalorder %s232, 13
          %s234 = scalar_select %p233, %s232, 13
          %s235 = smul.u32 128, %s234
          %p236 = scmp.lt.s32.totalorder %s231, 24
          %s237 = scalar_select %p236, %s231, 24
          %s238 = smul.addr %s237, 8
          %s239 = scalar_lea.vmem %s0, %s238
          %s240 = smul.u32 13, %s13
          %s241 = ssub.s32 25, %s240
          %p242 = scmp.lt.s32.totalorder %s241, 13
          %s243 = scalar_select %p242, %s241, 13
          %s244 = smul.u32 128, %s243
        $region44: #{linear4_forward.1} parent=39 // pred_fallthru
          _
      $region40: #{linear4_forward.1} parent=5 // pred_fallthru
        _
      %p245 = scmp.le.s32.totalorder 1, %s13
      %p246 = scmp.lt.s32.totalorder %s13, 3
      %p247 = pnand %p245, %p246
      %p248 = pneg %p247
      // Predicated region
      $region45: #{linear4_forward.1} parent=5 // pred_check
        _
      $region46: #{linear4_forward.1} parent=5 // pred_check_branch
        %250 = sbr.rel (%p247) target = $region48
      $region47: #{linear4_forward.1} parent=5 // pred_region
        %s251 = ssub.s32 %s13, 1
        %s252 = smul.u32 13, %s18
        %s253 = ssub.s32 25, %s252
        %p254 = scmp.lt.s32.totalorder %s253, 13
        %s255 = scalar_select %p254, %s253, 13
        %s256 = smul.u32 128, %s255
        %p257 = scmp.lt.s32.totalorder %s252, 24
        %s258 = scalar_select %p257, %s252, 24
        %s259 = smul.addr %s258, 8
        %s260 = scalar_lea.vmem %s0, %s259
        %p261 = pneg %p39
        %p262 = pneg %p36
        %p263 = pneg %p60
        %p264 = pneg %p57
        %p265 = pneg %p81
        %p266 = pneg %p78
        %p267 = pneg %p102
        %p268 = pneg %p99
        %p269 = pneg %p123
        %p270 = pneg %p120
        %p271 = pneg %p144
        %p272 = pneg %p141
        %p273 = pneg %p165
        %p274 = pneg %p162
        %p275 = pneg %p191
        %p276 = pneg %p188
        %s277 = sand.u32 %s178, 1
        %s278 = sand.u32 %s178, 1
        %s279 = smul.addr %s278, 52
        %s280 = scalar_lea.vmem [#allocation2], %s279
        %s281 = smul.u32 13, %s18
        %s282 = ssub.s32 25, %s281
        %p283 = scmp.lt.s32.totalorder %s282, 13
        %s284 = scalar_select %p283, %s282, 13
        %s285 = smul.u32 128, %s284
        %p286 = scmp.lt.s32.totalorder %s281, 24
        %s287 = scalar_select %p286, %s281, 24
        %s288 = smul.addr %s287, 8
        %s289 = scalar_lea.vmem %s0, %s288
        %s290 = smul.u32 13, %s18
        %s291 = ssub.s32 25, %s290
        %p292 = scmp.lt.s32.totalorder %s291, 13
        %s293 = scalar_select %p292, %s291, 13
        %s294 = smul.u32 128, %s293
        %s295 = smul.u32 13, %s18
        %s296 = ssub.s32 25, %s295
        %p297 = scmp.lt.s32.totalorder %s296, 13
        %s298 = scalar_select %p297, %s296, 13
        %s299 = smul.u32 64, %s298
        %v301 = vld [vmem:[%s289] sm:$0xff]
        %v302 = vld [vmem:[%s289 + $0x8] sm:$0xff]
        %v303 = vld [vmem:[%s289 + $0x10] sm:$0xff]
        %v304 = vld [vmem:[%s289 + $0x18] sm:$0xff]
        %v305 = vld [vmem:[%s289 + $0x20] sm:$0xff]
        %v306 = vld [vmem:[%s289 + $0x28] sm:$0xff]
        %v307 = vld [vmem:[%s289 + $0x30] sm:$0xff]
        %v308 = vld [vmem:[%s289 + $0x38] sm:$0xff]
        %v309 = vld [vmem:[%s289 + $0x40] sm:$0xff]
        %v310 = vld [vmem:[%s289 + $0x48] sm:$0xff]
        %v311 = vld [vmem:[%s289 + $0x50] sm:$0xff]
        %v312 = vld [vmem:[%s289 + $0x58] sm:$0xff]
        %v313 = vld [vmem:[%s289 + $0x60] sm:$0xff]
        %v314 = vpack.c.bf16 %v302, %v301
        %v315 = vpack.c.bf16 %v304, %v303
        %v316 = vpack.c.bf16 %v306, %v305
        %v317 = vpack.c.bf16 %v308, %v307
        %v318 = vpack.c.bf16 %v310, %v309
        %v319 = vpack.c.bf16 %v312, %v311
        %v320 = vpack.c.bf16 %v313, %v313
        %v321 = vld [vmem:[%s1] sm:$0xf]
        %v322 = vld [vmem:[%s1 + $0x4] sm:$0xf]
        %v323 = vld [vmem:[%s1 + $0x8] sm:$0xf]
        %v324 = vld [vmem:[%s1 + $0xc] sm:$0xf]
        %v325 = vld [vmem:[%s2] sm:$0x1]
        %v327 = vlaneseq
        %v328 = vshrl.u32 %v327, 7
        %v329 = vsub.s32 0, %v328
        %v330 = vrot.slane %v325, %v329
        %v336 = vunpack.c.l.b16 %v321
        %v337 = vunpack.c.l.b16 %v322
        %v338 = vunpack.c.l.b16 %v323
        %v339 = vunpack.c.l.b16 %v324
        %v340 = vpack.c.b16 %v337, %v336
        %v341 = vpack.c.b16 %v339, %v338
        %vm344 = vcmask 261120
        %v346 = vsel %vm344, %v314, 0
        %v349 = vsel %vm344, %v315, 0
        %v352 = vsel %vm344, %v316, 0
        %v355 = vsel %vm344, %v317, 0
        %v358 = vsel %vm344, %v318, 0
        %v361 = vsel %vm344, %v319, 0
        %v364 = vsel %vm344, %v320, 0
        %366 = vmatprep.subr.bf16.mxu0 0
        %367 = vmatpush1.bf16.msra.mxu0 0
        %368 = vmatprep.subr.bf16.mxu0 0
        %369 = vmatpush1.bf16.msra.mxu0 0
        %370 = vmatprep.subr.bf16.mxu0 0
        %371 = vmatpush1.bf16.msra.mxu0 0
        %372 = vmatprep.subr.bf16.mxu0 0
        %373 = vmatpush1.bf16.msra.mxu0 0
        %374 = vmatprep.subr.bf16.mxu0 0
        %375 = vmatpush1.bf16.msra.mxu0 0
        %376 = vmatprep.subr.bf16.mxu0 0
        %377 = vmatpush1.bf16.msra.mxu0 0
        %378 = vmatprep.subr.bf16.mxu0 0
        %379 = vmatpush1.bf16.msra.mxu0 %v341
        %380 = vmatprep.subr.bf16.mxu0 0
        %381 = vmatpush1.bf16.msra.mxu0 %v340
        %382 = vmatprep.subr.bf16.mxu0 0
        %383 = vmatpush2.bf16.msra.mxu0 0
        %384 = vmatprep.subr.bf16.mxu0 0
        %385 = vmatpush2.bf16.msra.mxu0 0
        %386 = vmatprep.subr.bf16.mxu0 0
        %387 = vmatpush2.bf16.msra.mxu0 0
        %388 = vmatprep.subr.bf16.mxu0 0
        %389 = vmatpush2.bf16.msra.mxu0 0
        %390 = vmatprep.subr.bf16.mxu0 0
        %391 = vmatpush2.bf16.msra.mxu0 0
        %392 = vmatprep.subr.bf16.mxu0 0
        %393 = vmatpush2.bf16.msra.mxu0 0
        %394 = vmatprep.subr.bf16.mxu0 0
        %395 = vmatpush2.bf16.msra.mxu0 0
        %396 = vmatprep.subr.bf16.mxu0 0
        %397 = vmatpush2.bf16.msra.mxu0 0
        %398 = vmatprep.mubr.bf16.mxu0 0
        %399 = vmatmul.mubr.bf16.gmra.mxu0 %v346
        %v400 = vpop.f32.mrf.mxu0
        %v401 = vadd.f32 %v330, %v400
        %v402 = vpop.f32.mrf.mxu0
        %v403 = vpop.f32.mrf.mxu0
        %v404 = vadd.f32 %v330, %v403
        %v405 = vpop.f32.mrf.mxu0
        %406 = vmatprep.mubr.bf16.mxu0 0
        %407 = vmatmul.mubr.bf16.gmra.mxu0 %v349
        %v408 = vpop.f32.mrf.mxu0
        %v409 = vadd.f32 %v330, %v408
        %v410 = vpop.f32.mrf.mxu0
        %v411 = vpop.f32.mrf.mxu0
        %v412 = vadd.f32 %v330, %v411
        %v413 = vpop.f32.mrf.mxu0
        %414 = vmatprep.mubr.bf16.mxu0 0
        %415 = vmatmul.mubr.bf16.gmra.mxu0 %v352
        %v416 = vpop.f32.mrf.mxu0
        %v417 = vadd.f32 %v330, %v416
        %v418 = vpop.f32.mrf.mxu0
        %v419 = vpop.f32.mrf.mxu0
        %v420 = vadd.f32 %v330, %v419
        %v421 = vpop.f32.mrf.mxu0
        %422 = vmatprep.mubr.bf16.mxu0 0
        %423 = vmatmul.mubr.bf16.gmra.mxu0 %v355
        %v424 = vpop.f32.mrf.mxu0
        %v425 = vadd.f32 %v330, %v424
        %v426 = vpop.f32.mrf.mxu0
        %v427 = vpop.f32.mrf.mxu0
        %v428 = vadd.f32 %v330, %v427
        %v429 = vpop.f32.mrf.mxu0
        %430 = vmatprep.mubr.bf16.mxu0 0
        %431 = vmatmul.mubr.bf16.gmra.mxu0 %v358
        %v432 = vpop.f32.mrf.mxu0
        %v433 = vadd.f32 %v330, %v432
        %v434 = vpop.f32.mrf.mxu0
        %v435 = vpop.f32.mrf.mxu0
        %v436 = vadd.f32 %v330, %v435
        %v437 = vpop.f32.mrf.mxu0
        %438 = vmatprep.mubr.bf16.mxu0 0
        %439 = vmatmul.mubr.bf16.gmra.mxu0 %v361
        %v440 = vpop.f32.mrf.mxu0
        %v441 = vadd.f32 %v330, %v440
        %v442 = vpop.f32.mrf.mxu0
        %v443 = vpop.f32.mrf.mxu0
        %v444 = vadd.f32 %v330, %v443
        %v445 = vpop.f32.mrf.mxu0
        %446 = vmatprep.mubr.bf16.mxu0 0
        %447 = vmatmul.mubr.bf16.gmra.mxu0 %v364
        %v448 = vpop.f32.mrf.mxu0
        %v449 = vadd.f32 %v330, %v448
        %v450 = vpop.f32.mrf.mxu0
        %v451 = vpop.f32.mrf.mxu0
        %v452 = vpop.f32.mrf.mxu0
        %453 = vdwg.mxu0
        %v454 = vpack.c.bf16 %v404, %v401
        %v455 = vpack.c.bf16 %v412, %v409
        %v456 = vpack.c.bf16 %v420, %v417
        %v457 = vpack.c.bf16 %v428, %v425
        %v458 = vpack.c.bf16 %v436, %v433
        %v459 = vpack.c.bf16 %v444, %v441
        %v460 = vpack.c.bf16 %v449, %v449
        %v461 = vtanh.bf16.pop %v454
        %v462 = vtanh.bf16.pop %v455
        %v463 = vtanh.bf16.pop %v456
        %v464 = vtanh.bf16.pop %v457
        %v465 = vtanh.bf16.pop %v458
        %v466 = vtanh.bf16.pop %v459
        %v467 = vtanh.bf16.pop %v460
        %v468 = vld [vmem:[%s3] sm:$0xf]
        %v469 = vld [vmem:[%s3 + $0x4] sm:$0xf]
        %v470 = vld [vmem:[%s3 + $0x8] sm:$0xf]
        %v471 = vld [vmem:[%s3 + $0xc] sm:$0xf]
        %v472 = vld [vmem:[%s3 + $0x10] sm:$0xf]
        %v473 = vld [vmem:[%s3 + $0x14] sm:$0xf]
        %v474 = vld [vmem:[%s3 + $0x18] sm:$0xf]
        %v475 = vld [vmem:[%s3 + $0x1c] sm:$0xf]
        %v476 = vld [vmem:[%s3 + $0x20] sm:$0xf]
        %v477 = vld [vmem:[%s3 + $0x24] sm:$0xf]
        %v478 = vld [vmem:[%s3 + $0x28] sm:$0xf]
        %v479 = vld [vmem:[%s3 + $0x2c] sm:$0xf]
        %v480 = vld [vmem:[%s3 + $0x30] sm:$0xf]
        %v481 = vld [vmem:[%s3 + $0x34] sm:$0xf]
        %v482 = vld [vmem:[%s3 + $0x38] sm:$0xf]
        %v483 = vld [vmem:[%s3 + $0x3c] sm:$0xf]
        %v484 = vld [vmem:[%s4] sm:$0x1]
        %v486 = vlaneseq
        %v487 = vshrl.u32 %v486, 7
        %v488 = vsub.s32 0, %v487
        %v489 = vrot.slane %v484, %v488
        %v507 = vunpack.c.l.b16 %v468
        %v508 = vunpack.c.l.b16 %v469
        %v509 = vunpack.c.l.b16 %v470
        %v510 = vunpack.c.l.b16 %v471
        %v511 = vunpack.c.l.b16 %v472
        %v512 = vunpack.c.l.b16 %v473
        %v513 = vunpack.c.l.b16 %v474
        %v514 = vunpack.c.l.b16 %v475
        %v515 = vunpack.c.l.b16 %v476
        %v516 = vunpack.c.l.b16 %v477
        %v517 = vunpack.c.l.b16 %v478
        %v518 = vunpack.c.l.b16 %v479
        %v519 = vunpack.c.l.b16 %v480
        %v520 = vunpack.c.l.b16 %v481
        %v521 = vunpack.c.l.b16 %v482
        %v522 = vunpack.c.l.b16 %v483
        %v523 = vpack.c.b16 %v508, %v507
        %v524 = vpack.c.b16 %v510, %v509
        %v525 = vpack.c.b16 %v512, %v511
        %v526 = vpack.c.b16 %v514, %v513
        %v527 = vpack.c.b16 %v516, %v515
        %v528 = vpack.c.b16 %v518, %v517
        %v529 = vpack.c.b16 %v520, %v519
        %v530 = vpack.c.b16 %v522, %v521
        %539 = vmatprep.subr.bf16.mxu0 0
        %540 = vmatpush1.bf16.msra.mxu0 %v530
        %541 = vmatprep.subr.bf16.mxu0 0
        %542 = vmatpush1.bf16.msra.mxu0 %v529
        %543 = vmatprep.subr.bf16.mxu0 0
        %544 = vmatpush1.bf16.msra.mxu0 %v528
        %545 = vmatprep.subr.bf16.mxu0 0
        %546 = vmatpush1.bf16.msra.mxu0 %v527
        %547 = vmatprep.subr.bf16.mxu0 0
        %548 = vmatpush1.bf16.msra.mxu0 %v526
        %549 = vmatprep.subr.bf16.mxu0 0
        %550 = vmatpush1.bf16.msra.mxu0 %v525
        %551 = vmatprep.subr.bf16.mxu0 0
        %552 = vmatpush1.bf16.msra.mxu0 %v524
        %553 = vmatprep.subr.bf16.mxu0 0
        %554 = vmatpush1.bf16.msra.mxu0 %v523
        %555 = vmatprep.subr.bf16.mxu0 0
        %556 = vmatpush2.bf16.msra.mxu0 0
        %557 = vmatprep.subr.bf16.mxu0 0
        %558 = vmatpush2.bf16.msra.mxu0 0
        %559 = vmatprep.subr.bf16.mxu0 0
        %560 = vmatpush2.bf16.msra.mxu0 0
        %561 = vmatprep.subr.bf16.mxu0 0
        %562 = vmatpush2.bf16.msra.mxu0 0
        %563 = vmatprep.subr.bf16.mxu0 0
        %564 = vmatpush2.bf16.msra.mxu0 0
        %565 = vmatprep.subr.bf16.mxu0 0
        %566 = vmatpush2.bf16.msra.mxu0 0
        %567 = vmatprep.subr.bf16.mxu0 0
        %568 = vmatpush2.bf16.msra.mxu0 0
        %569 = vmatprep.subr.bf16.mxu0 0
        %570 = vmatpush2.bf16.msra.mxu0 0
        %571 = vmatprep.mubr.bf16.mxu0 0
        %572 = vmatmul.mubr.bf16.gmra.mxu0 %v461
        %v573 = vpop.f32.mrf.mxu0
        %v574 = vadd.f32 %v489, %v573
        %v575 = vpop.f32.mrf.mxu0
        %v576 = vpop.f32.mrf.mxu0
        %v577 = vadd.f32 %v489, %v576
        %v578 = vpop.f32.mrf.mxu0
        %579 = vmatprep.mubr.bf16.mxu0 0
        %580 = vmatmul.mubr.bf16.gmra.mxu0 %v462
        %v581 = vpop.f32.mrf.mxu0
        %v582 = vadd.f32 %v489, %v581
        %v583 = vpop.f32.mrf.mxu0
        %v584 = vpop.f32.mrf.mxu0
        %v585 = vadd.f32 %v489, %v584
        %v586 = vpop.f32.mrf.mxu0
        %587 = vmatprep.mubr.bf16.mxu0 0
        %588 = vmatmul.mubr.bf16.gmra.mxu0 %v463
        %v589 = vpop.f32.mrf.mxu0
        %v590 = vadd.f32 %v489, %v589
        %v591 = vpop.f32.mrf.mxu0
        %v592 = vpop.f32.mrf.mxu0
        %v593 = vadd.f32 %v489, %v592
        %v594 = vpop.f32.mrf.mxu0
        %595 = vmatprep.mubr.bf16.mxu0 0
        %596 = vmatmul.mubr.bf16.gmra.mxu0 %v464
        %v597 = vpop.f32.mrf.mxu0
        %v598 = vadd.f32 %v489, %v597
        %v599 = vpop.f32.mrf.mxu0
        %v600 = vpop.f32.mrf.mxu0
        %v601 = vadd.f32 %v489, %v600
        %v602 = vpop.f32.mrf.mxu0
        %603 = vmatprep.mubr.bf16.mxu0 0
        %604 = vmatmul.mubr.bf16.gmra.mxu0 %v465
        %v605 = vpop.f32.mrf.mxu0
        %v606 = vadd.f32 %v489, %v605
        %v607 = vpop.f32.mrf.mxu0
        %v608 = vpop.f32.mrf.mxu0
        %v609 = vadd.f32 %v489, %v608
        %v610 = vpop.f32.mrf.mxu0
        %611 = vmatprep.mubr.bf16.mxu0 0
        %612 = vmatmul.mubr.bf16.gmra.mxu0 %v466
        %v613 = vpop.f32.mrf.mxu0
        %v614 = vadd.f32 %v489, %v613
        %v615 = vpop.f32.mrf.mxu0
        %v616 = vpop.f32.mrf.mxu0
        %v617 = vadd.f32 %v489, %v616
        %v618 = vpop.f32.mrf.mxu0
        %619 = vmatprep.mubr.bf16.mxu0 0
        %620 = vmatmul.mubr.bf16.gmra.mxu0 %v467
        %v621 = vpop.f32.mrf.mxu0
        %v622 = vadd.f32 %v489, %v621
        %v623 = vpop.f32.mrf.mxu0
        %v624 = vpop.f32.mrf.mxu0
        %v625 = vpop.f32.mrf.mxu0
        %626 = vdwg.mxu0
        %v627 = vpack.c.bf16 %v577, %v574
        %v628 = vpack.c.bf16 %v585, %v582
        %v629 = vpack.c.bf16 %v593, %v590
        %v630 = vpack.c.bf16 %v601, %v598
        %v631 = vpack.c.bf16 %v609, %v606
        %v632 = vpack.c.bf16 %v617, %v614
        %v633 = vpack.c.bf16 %v622, %v622
        %v634 = vtanh.bf16.pop %v627
        %v635 = vtanh.bf16.pop %v628
        %v636 = vtanh.bf16.pop %v629
        %v637 = vtanh.bf16.pop %v630
        %v638 = vtanh.bf16.pop %v631
        %v639 = vtanh.bf16.pop %v632
        %v640 = vtanh.bf16.pop %v633
        %v641 = vld [vmem:[%s5] sm:$0xf]
        %v642 = vld [vmem:[%s5 + $0x4] sm:$0xf]
        %v643 = vld [vmem:[%s5 + $0x8] sm:$0xf]
        %v644 = vld [vmem:[%s5 + $0xc] sm:$0xf]
        %v645 = vld [vmem:[%s5 + $0x10] sm:$0xf]
        %v646 = vld [vmem:[%s5 + $0x14] sm:$0xf]
        %v647 = vld [vmem:[%s5 + $0x18] sm:$0xf]
        %v648 = vld [vmem:[%s5 + $0x1c] sm:$0xf]
        %v649 = vld [vmem:[%s5 + $0x20] sm:$0xf]
        %v650 = vld [vmem:[%s5 + $0x24] sm:$0xf]
        %v651 = vld [vmem:[%s5 + $0x28] sm:$0xf]
        %v652 = vld [vmem:[%s5 + $0x2c] sm:$0xf]
        %v653 = vld [vmem:[%s5 + $0x30] sm:$0xf]
        %v654 = vld [vmem:[%s5 + $0x34] sm:$0xf]
        %v655 = vld [vmem:[%s5 + $0x38] sm:$0xf]
        %v656 = vld [vmem:[%s5 + $0x3c] sm:$0xf]
        %v657 = vld [vmem:[%s6] sm:$0x1]
        %v659 = vlaneseq
        %v660 = vshrl.u32 %v659, 7
        %v661 = vsub.s32 0, %v660
        %v662 = vrot.slane %v657, %v661
        %v680 = vunpack.c.l.b16 %v641
        %v681 = vunpack.c.l.b16 %v642
        %v682 = vunpack.c.l.b16 %v643
        %v683 = vunpack.c.l.b16 %v644
        %v684 = vunpack.c.l.b16 %v645
        %v685 = vunpack.c.l.b16 %v646
        %v686 = vunpack.c.l.b16 %v647
        %v687 = vunpack.c.l.b16 %v648
        %v688 = vunpack.c.l.b16 %v649
        %v689 = vunpack.c.l.b16 %v650
        %v690 = vunpack.c.l.b16 %v651
        %v691 = vunpack.c.l.b16 %v652
        %v692 = vunpack.c.l.b16 %v653
        %v693 = vunpack.c.l.b16 %v654
        %v694 = vunpack.c.l.b16 %v655
        %v695 = vunpack.c.l.b16 %v656
        %v696 = vpack.c.b16 %v681, %v680
        %v697 = vpack.c.b16 %v683, %v682
        %v698 = vpack.c.b16 %v685, %v684
        %v699 = vpack.c.b16 %v687, %v686
        %v700 = vpack.c.b16 %v689, %v688
        %v701 = vpack.c.b16 %v691, %v690
        %v702 = vpack.c.b16 %v693, %v692
        %v703 = vpack.c.b16 %v695, %v694
        %712 = vmatprep.subr.bf16.mxu0 0
        %713 = vmatpush1.bf16.msra.mxu0 %v703
        %714 = vmatprep.subr.bf16.mxu0 0
        %715 = vmatpush1.bf16.msra.mxu0 %v702
        %716 = vmatprep.subr.bf16.mxu0 0
        %717 = vmatpush1.bf16.msra.mxu0 %v701
        %718 = vmatprep.subr.bf16.mxu0 0
        %719 = vmatpush1.bf16.msra.mxu0 %v700
        %720 = vmatprep.subr.bf16.mxu0 0
        %721 = vmatpush1.bf16.msra.mxu0 %v699
        %722 = vmatprep.subr.bf16.mxu0 0
        %723 = vmatpush1.bf16.msra.mxu0 %v698
        %724 = vmatprep.subr.bf16.mxu0 0
        %725 = vmatpush1.bf16.msra.mxu0 %v697
        %726 = vmatprep.subr.bf16.mxu0 0
        %727 = vmatpush1.bf16.msra.mxu0 %v696
        %728 = vmatprep.subr.bf16.mxu0 0
        %729 = vmatpush2.bf16.msra.mxu0 0
        %730 = vmatprep.subr.bf16.mxu0 0
        %731 = vmatpush2.bf16.msra.mxu0 0
        %732 = vmatprep.subr.bf16.mxu0 0
        %733 = vmatpush2.bf16.msra.mxu0 0
        %734 = vmatprep.subr.bf16.mxu0 0
        %735 = vmatpush2.bf16.msra.mxu0 0
        %736 = vmatprep.subr.bf16.mxu0 0
        %737 = vmatpush2.bf16.msra.mxu0 0
        %738 = vmatprep.subr.bf16.mxu0 0
        %739 = vmatpush2.bf16.msra.mxu0 0
        %740 = vmatprep.subr.bf16.mxu0 0
        %741 = vmatpush2.bf16.msra.mxu0 0
        %742 = vmatprep.subr.bf16.mxu0 0
        %743 = vmatpush2.bf16.msra.mxu0 0
        %744 = vmatprep.mubr.bf16.mxu0 0
        %745 = vmatmul.mubr.bf16.gmra.mxu0 %v634
        %v746 = vpop.f32.mrf.mxu0
        %v747 = vadd.f32 %v662, %v746
        %v748 = vpop.f32.mrf.mxu0
        %v749 = vpop.f32.mrf.mxu0
        %v750 = vadd.f32 %v662, %v749
        %v751 = vpop.f32.mrf.mxu0
        %752 = vmatprep.mubr.bf16.mxu0 0
        %753 = vmatmul.mubr.bf16.gmra.mxu0 %v635
        %v754 = vpop.f32.mrf.mxu0
        %v755 = vadd.f32 %v662, %v754
        %v756 = vpop.f32.mrf.mxu0
        %v757 = vpop.f32.mrf.mxu0
        %v758 = vadd.f32 %v662, %v757
        %v759 = vpop.f32.mrf.mxu0
        %760 = vmatprep.mubr.bf16.mxu0 0
        %761 = vmatmul.mubr.bf16.gmra.mxu0 %v636
        %v762 = vpop.f32.mrf.mxu0
        %v763 = vadd.f32 %v662, %v762
        %v764 = vpop.f32.mrf.mxu0
        %v765 = vpop.f32.mrf.mxu0
        %v766 = vadd.f32 %v662, %v765
        %v767 = vpop.f32.mrf.mxu0
        %768 = vmatprep.mubr.bf16.mxu0 0
        %769 = vmatmul.mubr.bf16.gmra.mxu0 %v637
        %v770 = vpop.f32.mrf.mxu0
        %v771 = vadd.f32 %v662, %v770
        %v772 = vpop.f32.mrf.mxu0
        %v773 = vpop.f32.mrf.mxu0
        %v774 = vadd.f32 %v662, %v773
        %v775 = vpop.f32.mrf.mxu0
        %776 = vmatprep.mubr.bf16.mxu0 0
        %777 = vmatmul.mubr.bf16.gmra.mxu0 %v638
        %v778 = vpop.f32.mrf.mxu0
        %v779 = vadd.f32 %v662, %v778
        %v780 = vpop.f32.mrf.mxu0
        %v781 = vpop.f32.mrf.mxu0
        %v782 = vadd.f32 %v662, %v781
        %v783 = vpop.f32.mrf.mxu0
        %784 = vmatprep.mubr.bf16.mxu0 0
        %785 = vmatmul.mubr.bf16.gmra.mxu0 %v639
        %v786 = vpop.f32.mrf.mxu0
        %v787 = vadd.f32 %v662, %v786
        %v788 = vpop.f32.mrf.mxu0
        %v789 = vpop.f32.mrf.mxu0
        %v790 = vadd.f32 %v662, %v789
        %v791 = vpop.f32.mrf.mxu0
        %792 = vmatprep.mubr.bf16.mxu0 0
        %793 = vmatmul.mubr.bf16.gmra.mxu0 %v640
        %v794 = vpop.f32.mrf.mxu0
        %v795 = vadd.f32 %v662, %v794
        %v796 = vpop.f32.mrf.mxu0
        %v797 = vpop.f32.mrf.mxu0
        %v798 = vpop.f32.mrf.mxu0
        %799 = vdwg.mxu0
        %v800 = vpack.c.bf16 %v750, %v747
        %v801 = vpack.c.bf16 %v758, %v755
        %v802 = vpack.c.bf16 %v766, %v763
        %v803 = vpack.c.bf16 %v774, %v771
        %v804 = vpack.c.bf16 %v782, %v779
        %v805 = vpack.c.bf16 %v790, %v787
        %v806 = vpack.c.bf16 %v795, %v795
        %v814 = vunpack.c.l.b16 %v800
        %v815 = vunpack.c.h.b16 %v800
        %v816 = vunpack.c.l.b16 %v801
        %v817 = vunpack.c.h.b16 %v801
        %v818 = vunpack.c.l.b16 %v802
        %v819 = vunpack.c.h.b16 %v802
        %v820 = vunpack.c.l.b16 %v803
        %v821 = vunpack.c.h.b16 %v803
        %v822 = vunpack.c.l.b16 %v804
        %v823 = vunpack.c.h.b16 %v804
        %v824 = vunpack.c.l.b16 %v805
        %v825 = vunpack.c.h.b16 %v805
        %v826 = vunpack.c.l.b16 %v806
        %v827 = vpack.c.b16 %v814, %v814
        %v828 = vpack.c.b16 %v815, %v815
        %v829 = vpack.c.b16 %v816, %v816
        %v830 = vpack.c.b16 %v817, %v817
        %v831 = vpack.c.b16 %v818, %v818
        %v832 = vpack.c.b16 %v819, %v819
        %v833 = vpack.c.b16 %v820, %v820
        %v834 = vpack.c.b16 %v821, %v821
        %v835 = vpack.c.b16 %v822, %v822
        %v836 = vpack.c.b16 %v823, %v823
        %v837 = vpack.c.b16 %v824, %v824
        %v838 = vpack.c.b16 %v825, %v825
        %v839 = vpack.c.b16 %v826, %v826
        %853 = vst [vmem:[%s280] sm:$0xf] %v827
        %854 = vst [vmem:[%s280 + $0x4] sm:$0xf] %v828
        %855 = vst [vmem:[%s280 + $0x8] sm:$0xf] %v829
        %856 = vst [vmem:[%s280 + $0xc] sm:$0xf] %v830
        %857 = vst [vmem:[%s280 + $0x10] sm:$0xf] %v831
        %858 = vst [vmem:[%s280 + $0x14] sm:$0xf] %v832
        %859 = vst [vmem:[%s280 + $0x18] sm:$0xf] %v833
        %860 = vst [vmem:[%s280 + $0x1c] sm:$0xf] %v834
        %861 = vst [vmem:[%s280 + $0x20] sm:$0xf] %v835
        %862 = vst [vmem:[%s280 + $0x24] sm:$0xf] %v836
        %863 = vst [vmem:[%s280 + $0x28] sm:$0xf] %v837
        %864 = vst [vmem:[%s280 + $0x2c] sm:$0xf] %v838
        %865 = vst [vmem:[%s280 + $0x30] sm:$0xf] %v839
        %s866 = sand.u32 %s178, 1
        %s867 = sand.u32 %s178, 1
        %s868 = smul.addr %s867, 52
        %s869 = scalar_lea.vmem [#allocation2], %s868
        // Predicated region
        $region49: #{linear4_forward.1} parent=47 // pred_check
          %p870 = pneg %p188
        $region50: #{linear4_forward.1} parent=47 // pred_check_branch
          %872 = sbr.rel (%p870) target = $region52
        $region51: #{linear4_forward.1} parent=47 // pred_region
          %s873 = smul.u32 13, %s18
          %s874 = ssub.s32 25, %s873
          %p875 = scmp.lt.s32.totalorder %s874, 13
          %s876 = scalar_select %p875, %s874, 13
          %s877 = smul.u32 64, %s876
          %p878 = scmp.ne.s32.totalorder 0, %s877
          %s879 = smul.addr %s873, 4
          %s880 = scalar_lea.vmem %s7, %s879
          // Predicated region
          $region53: #{linear4_forward.1} parent=51 // pred_check
            %p881 = pneg %p878
          $region54: #{linear4_forward.1} parent=51 // pred_check_branch
            %883 = sbr.rel (%p881) target = $region56
          $region55: #{linear4_forward.1} parent=51 // pred_region
            // Predicated region
            $region57: #{linear4_forward.1} parent=55 // pred_check
              _
            $region58: #{linear4_forward.1} parent=55 // pred_check_branch
              %885 = sbr.rel target = $region60
            $region59: #{linear4_forward.1} parent=55 // pred_region
              // Predicated region
              $region79: #{linear4_forward.1} parent=59 // pred_check
                _
              $region80: #{linear4_forward.1} parent=59 // pred_check_branch
                %960 = sbr.rel (0) target = $region82
              $region81: #{linear4_forward.1} parent=59 // pred_region
                %s962 = ssub.s32 16, 1
                %s963 = sdiv.u32.pop %s876, 13
                %s964 = srem.u32.pop %s876, 13
                // While loop
                $region83: #{linear4_forward.1} parent=81 // loop_pre_header
                  _
                $region84: #{linear4_forward.1} parent=81 // loop_header
                  %s966 = sphi 0, %s968
                  %p967 = scmp.ge.s32.totalorder %s966, %s963
                  %s971 = sphi 0, %s1002
                  %s972 = sphi %s869, %s1005
                  %s973 = sphi %s880, %s1006
                $region85: #{linear4_forward.1} parent=81 // loop_header_branch
                  %970 = sbr.rel (%p967) target = $region89
                $region86: #{linear4_forward.1} parent=81 // loop_body
                  %v974 = vld [vmem:[%s972] sm:%s962]
                  %975 = vst [vmem:[%s973] sm:%s962] %v974
                  %v976 = vld [vmem:[%s972 + $0x4] sm:%s962]
                  %977 = vst [vmem:[%s973 + $0x4] sm:%s962] %v976
                  %v978 = vld [vmem:[%s972 + $0x8] sm:%s962]
                  %979 = vst [vmem:[%s973 + $0x8] sm:%s962] %v978
                  %v980 = vld [vmem:[%s972 + $0xc] sm:%s962]
                  %981 = vst [vmem:[%s973 + $0xc] sm:%s962] %v980
                  %v982 = vld [vmem:[%s972 + $0x10] sm:%s962]
                  %983 = vst [vmem:[%s973 + $0x10] sm:%s962] %v982
                  %v984 = vld [vmem:[%s972 + $0x14] sm:%s962]
                  %985 = vst [vmem:[%s973 + $0x14] sm:%s962] %v984
                  %v986 = vld [vmem:[%s972 + $0x18] sm:%s962]
                  %987 = vst [vmem:[%s973 + $0x18] sm:%s962] %v986
                  %v988 = vld [vmem:[%s972 + $0x1c] sm:%s962]
                  %989 = vst [vmem:[%s973 + $0x1c] sm:%s962] %v988
                  %v990 = vld [vmem:[%s972 + $0x20] sm:%s962]
                  %991 = vst [vmem:[%s973 + $0x20] sm:%s962] %v990
                  %v992 = vld [vmem:[%s972 + $0x24] sm:%s962]
                  %993 = vst [vmem:[%s973 + $0x24] sm:%s962] %v992
                  %v994 = vld [vmem:[%s972 + $0x28] sm:%s962]
                  %995 = vst [vmem:[%s973 + $0x28] sm:%s962] %v994
                  %v996 = vld [vmem:[%s972 + $0x2c] sm:%s962]
                  %997 = vst [vmem:[%s973 + $0x2c] sm:%s962] %v996
                  %v998 = vld [vmem:[%s972 + $0x30] sm:%s962]
                  %999 = vst [vmem:[%s973 + $0x30] sm:%s962] %v998
                  %s1000 = sadd.s32 1, %s971
                  %p1001 = scmp.ge.s32.totalorder %s1000, %s963
                  %s1002 = scalar_select %p1001, 0, %s1000
                  %s1003 = smul.u32 %s1002, 52
                  %s1004 = smul.u32 %s1002, 52
                  %s1005 = scalar_lea.vmem %s869, %s1003 [#allocation2]
                  %s1006 = scalar_lea.vmem %s880, %s1004
                $region87: #{linear4_forward.1} parent=81 // loop_footer
                  %s968 = sadd.s32 %s966, 1
                $region88: #{linear4_forward.1} parent=81 // loop_footer_branch
                  %965 = sbr.rel target = $region84
                $region89: #{linear4_forward.1} parent=81 // loop_exit
                  _
                %s1007 = sdiv.u32.pop %s876, 13
                %s1008 = srem.u32.pop %s876, 13
                %s1009 = smul.u32 %s1007, 13
                %s1010 = smul.u32 4, %s1009
                %s1011 = scalar_lea.vmem %s869, %s1010 [#allocation2]
                %s1012 = smul.u32 4, %s1009
                %s1013 = scalar_lea.vmem %s880, %s1012
                // While loop
                $region90: #{linear4_forward.1} parent=81 // loop_pre_header
                  _
                $region91: #{linear4_forward.1} parent=81 // loop_header
                  %s1015 = sphi 0, %s1017
                  %p1016 = scmp.ge.s32.totalorder %s1015, %s1008
                  %s1020 = sphi 0, %s1027
                  %s1021 = sphi %s1011, %s1030
                  %s1022 = sphi %s1013, %s1031
                $region92: #{linear4_forward.1} parent=81 // loop_header_branch
                  %1019 = sbr.rel (%p1016) target = $region96
                $region93: #{linear4_forward.1} parent=81 // loop_body
                  %v1023 = vld [vmem:[%s1021] sm:%s962]
                  %1024 = vst [vmem:[%s1022] sm:%s962] %v1023
                  %s1025 = sadd.s32 1, %s1020
                  %p1026 = scmp.ge.s32.totalorder %s1025, %s1008
                  %s1027 = scalar_select %p1026, 0, %s1025
                  %s1028 = smul.u32 %s1027, 4
                  %s1029 = smul.u32 %s1027, 4
                  %s1030 = scalar_lea.vmem %s1011, %s1028 [#allocation2]
                  %s1031 = scalar_lea.vmem %s1013, %s1029
                $region94: #{linear4_forward.1} parent=81 // loop_footer
                  %s1017 = sadd.s32 %s1015, 1
                $region95: #{linear4_forward.1} parent=81 // loop_footer_branch
                  %1014 = sbr.rel target = $region91
                $region96: #{linear4_forward.1} parent=81 // loop_exit
                  _
              $region82: #{linear4_forward.1} parent=59 // pred_fallthru
                _
            $region60: #{linear4_forward.1} parent=55 // pred_fallthru
              _
            // Predicated region
            $region61: #{linear4_forward.1} parent=55 // pred_check
              _
            $region62: #{linear4_forward.1} parent=55 // pred_check_branch
              %887 = sbr.rel (0) target = $region64
            $region63: #{linear4_forward.1} parent=55 // pred_region
              %s889 = ssub.s32 16, 1
              %s890 = sdiv.u32.pop %s876, 13
              %s891 = srem.u32.pop %s876, 13
              // While loop
              $region65: #{linear4_forward.1} parent=63 // loop_pre_header
                _
              $region66: #{linear4_forward.1} parent=63 // loop_header
                %s893 = sphi 0, %s895
                %p894 = scmp.ge.s32.totalorder %s893, %s890
                %s898 = sphi 0, %s929
                %s899 = sphi %s869, %s932
                %s900 = sphi %s880, %s933
              $region67: #{linear4_forward.1} parent=63 // loop_header_branch
                %897 = sbr.rel (%p894) target = $region71
              $region68: #{linear4_forward.1} parent=63 // loop_body
                %v901 = vld [vmem:[%s899] sm:%s889]
                %902 = vst [vmem:[%s900] sm:%s889] %v901
                %v903 = vld [vmem:[%s899 + $0x4] sm:%s889]
                %904 = vst [vmem:[%s900 + $0x4] sm:%s889] %v903
                %v905 = vld [vmem:[%s899 + $0x8] sm:%s889]
                %906 = vst [vmem:[%s900 + $0x8] sm:%s889] %v905
                %v907 = vld [vmem:[%s899 + $0xc] sm:%s889]
                %908 = vst [vmem:[%s900 + $0xc] sm:%s889] %v907
                %v909 = vld [vmem:[%s899 + $0x10] sm:%s889]
                %910 = vst [vmem:[%s900 + $0x10] sm:%s889] %v909
                %v911 = vld [vmem:[%s899 + $0x14] sm:%s889]
                %912 = vst [vmem:[%s900 + $0x14] sm:%s889] %v911
                %v913 = vld [vmem:[%s899 + $0x18] sm:%s889]
                %914 = vst [vmem:[%s900 + $0x18] sm:%s889] %v913
                %v915 = vld [vmem:[%s899 + $0x1c] sm:%s889]
                %916 = vst [vmem:[%s900 + $0x1c] sm:%s889] %v915
                %v917 = vld [vmem:[%s899 + $0x20] sm:%s889]
                %918 = vst [vmem:[%s900 + $0x20] sm:%s889] %v917
                %v919 = vld [vmem:[%s899 + $0x24] sm:%s889]
                %920 = vst [vmem:[%s900 + $0x24] sm:%s889] %v919
                %v921 = vld [vmem:[%s899 + $0x28] sm:%s889]
                %922 = vst [vmem:[%s900 + $0x28] sm:%s889] %v921
                %v923 = vld [vmem:[%s899 + $0x2c] sm:%s889]
                %924 = vst [vmem:[%s900 + $0x2c] sm:%s889] %v923
                %v925 = vld [vmem:[%s899 + $0x30] sm:%s889]
                %926 = vst [vmem:[%s900 + $0x30] sm:%s889] %v925
                %s927 = sadd.s32 1, %s898
                %p928 = scmp.ge.s32.totalorder %s927, %s890
                %s929 = scalar_select %p928, 0, %s927
                %s930 = smul.u32 %s929, 52
                %s931 = smul.u32 %s929, 52
                %s932 = scalar_lea.vmem %s869, %s930 [#allocation2]
                %s933 = scalar_lea.vmem %s880, %s931
              $region69: #{linear4_forward.1} parent=63 // loop_footer
                %s895 = sadd.s32 %s893, 1
              $region70: #{linear4_forward.1} parent=63 // loop_footer_branch
                %892 = sbr.rel target = $region66
              $region71: #{linear4_forward.1} parent=63 // loop_exit
                _
              %s934 = sdiv.u32.pop %s876, 13
              %s935 = srem.u32.pop %s876, 13
              %s936 = smul.u32 %s934, 13
              %s937 = smul.u32 4, %s936
              %s938 = scalar_lea.vmem %s869, %s937 [#allocation2]
              %s939 = smul.u32 4, %s936
              %s940 = scalar_lea.vmem %s880, %s939
              // While loop
              $region72: #{linear4_forward.1} parent=63 // loop_pre_header
                _
              $region73: #{linear4_forward.1} parent=63 // loop_header
                %s942 = sphi 0, %s944
                %p943 = scmp.ge.s32.totalorder %s942, %s935
                %s947 = sphi 0, %s954
                %s948 = sphi %s938, %s957
                %s949 = sphi %s940, %s958
              $region74: #{linear4_forward.1} parent=63 // loop_header_branch
                %946 = sbr.rel (%p943) target = $region78
              $region75: #{linear4_forward.1} parent=63 // loop_body
                %v950 = vld [vmem:[%s948] sm:%s889]
                %951 = vst [vmem:[%s949] sm:%s889] %v950
                %s952 = sadd.s32 1, %s947
                %p953 = scmp.ge.s32.totalorder %s952, %s935
                %s954 = scalar_select %p953, 0, %s952
                %s955 = smul.u32 %s954, 4
                %s956 = smul.u32 %s954, 4
                %s957 = scalar_lea.vmem %s938, %s955 [#allocation2]
                %s958 = scalar_lea.vmem %s940, %s956
              $region76: #{linear4_forward.1} parent=63 // loop_footer
                %s944 = sadd.s32 %s942, 1
              $region77: #{linear4_forward.1} parent=63 // loop_footer_branch
                %941 = sbr.rel target = $region73
              $region78: #{linear4_forward.1} parent=63 // loop_exit
                _
            $region64: #{linear4_forward.1} parent=55 // pred_fallthru
              _
          $region56: #{linear4_forward.1} parent=51 // pred_fallthru
            _
          %1032 = vnop
        $region52: #{linear4_forward.1} parent=47 // pred_fallthru
          _
      $region48: #{linear4_forward.1} parent=5 // pred_fallthru
        _
      %p1033 = scmp.le.s32.totalorder 2, %s13
      // Predicated region
      $region97: #{linear4_forward.1} parent=5 // pred_check
        %p1034 = pneg %p1033
      $region98: #{linear4_forward.1} parent=5 // pred_check_branch
        %1036 = sbr.rel (%p1034) target = $region100
      $region99: #{linear4_forward.1} parent=5 // pred_region
        %s1037 = ssub.s32 %s13, 2
        // Predicated region
        $region101: #{linear4_forward.1} parent=99 // pred_check
          %p1038 = pneg %p194
        $region102: #{linear4_forward.1} parent=99 // pred_check_branch
          %1040 = sbr.rel (%p1038) target = $region104
        $region103: #{linear4_forward.1} parent=99 // pred_region
          %s1041 = sand.u32 %s179, 1
          %s1042 = sand.u32 %s179, 1
          %s1043 = smul.addr %s1042, 52
          %s1044 = scalar_lea.vmem [#allocation2], %s1043
        $region104: #{linear4_forward.1} parent=99 // pred_fallthru
          _
      $region100: #{linear4_forward.1} parent=5 // pred_fallthru
        _
    $region6: #{linear4_forward.1} parent=1 // loop_footer
      %s17 = sadd.s32 1, %s13
    $region7: #{linear4_forward.1} parent=1 // loop_footer_branch
      %12 = sbr.rel target = $region3
    $region8: #{linear4_forward.1} parent=1 // loop_exit
      _

</llo_original>
